<compile_context>
chip_gen: v5e
topology: v5e:2x2
jax: 0.10.0
libtpu: 0.0.40
codegen_flags: <defaults>
</compile_context>

<pallas_src>
import functools

import jax
import jax.numpy as jnp
from jax.experimental import pallas as pl
from jax.experimental.pallas import tpu as pltpu

EPS = 1e-5                       # nn.BatchNorm2d default eps
LANES = 128                      # TPU lane width; packed K / Cout padded to this
VMEM_LIMIT = 48 * 1024 * 1024    # explicit scoped-VMEM cap (<= safe on v5e/v6e/v7x)
EPI_TILE = 512                   # epilogue row tile (~85% of HBM roofline)


def _round_up(x, m):
    return (x + m - 1) // m * m


def _pad_last(a, cp):
    pad = cp - a.shape[-1]
    if pad == 0:
        return a
    cfg = [(0, 0)] * (a.ndim - 1) + [(0, pad)]
    return jnp.pad(a, cfg)


def _pad_vec(v, cp):
    return jnp.pad(v, (0, cp - v.shape[0]))


# --------------------------------------------------------------------------
# Kernel 1: 3x3 conv as 3 contiguous MXU matmuls (kw folded into K)
#           + fused per-image BatchNorm statistics
# --------------------------------------------------------------------------
def _conv_stats_kernel(ph_ref, w_ref, y_ref, stats_ref, acc_ref, *, offs, ho, wo):
    """One grid step = one image.

    ph_ref   : (1, R, wo, Kp)      bf16  kw-folded, (parity-grouped) padded input
    w_ref    : (3, Kp, Cout_p)     bf16  kh-major weights (kw folded into Kp)
    y_ref    : (1, ho*wo, Cout_p)  bf16  raw conv output (pre-BN)
    stats_ref: (1, 2, Cout_p)      f32   per-image [sum(y); sum(y*y)]
    acc_ref  : (ho*wo, Cout_p)     f32   VMEM accumulator scratch
    """
    kp = ph_ref.shape[-1]
    m = ho * wo
    for t, off in enumerate(offs):
        # Contiguous leading-axis row slice; reshape is layout-free when wo % 8 == 0.
        win = ph_ref[0, off:off + ho, :, :].reshape(m, kp)
        part = jnp.dot(win, w_ref[t], preferred_element_type=jnp.float32)
        if t == 0:
            acc_ref[...] = part
        else:
            acc_ref[...] += part

    acc = acc_ref[...]
    y_ref[0] = acc.astype(y_ref.dtype)
    stats_ref[0, 0:1, :] = jnp.sum(acc, axis=0, keepdims=True)
    stats_ref[0, 1:2, :] = jnp.sum(acc * acc, axis=0, keepdims=True)


def _conv_stats(ph, w_packed, offs, ho, wo):
    n, r_rows, wo_, kp = ph.shape
    cout_p = w_packed.shape[-1]
    m = ho * wo
    kern = functools.partial(_conv_stats_kernel, offs=offs, ho=ho, wo=wo)
    return pl.pallas_call(
        kern,
        out_shape=(jax.ShapeDtypeStruct((n, m, cout_p), jnp.bfloat16),
                   jax.ShapeDtypeStruct((n, 2, cout_p), jnp.float32)),
        grid=(n,),
        in_specs=[
            pl.BlockSpec((1, r_rows, wo_, kp), lambda i: (i, 0, 0, 0)),
            pl.BlockSpec((3, kp, cout_p), lambda i: (0, 0, 0)),
        ],
        out_specs=(
            pl.BlockSpec((1, m, cout_p), lambda i: (i, 0, 0)),
            pl.BlockSpec((1, 2, cout_p), lambda i: (i, 0, 0)),
        ),
        scratch_shapes=[pltpu.VMEM((m, cout_p), jnp.float32)],
        compiler_params=pltpu.CompilerParams(
            dimension_semantics=("parallel",),   # per-image stats -> no carry
            vmem_limit_bytes=VMEM_LIMIT,
        ),
    )(ph, w_packed)


# --------------------------------------------------------------------------
# Kernel 2: streaming scale/shift FMA (+ optional residual add) + ReLU
# --------------------------------------------------------------------------
def _bn_relu_kernel(y_ref, scale_ref, shift_ref, o_ref):
    y = y_ref[...].astype(jnp.float32)
    o_ref[...] = jnp.maximum(y * scale_ref[...] + shift_ref[...],
                             0.0).astype(o_ref.dtype)


def _bn_add_relu_kernel(y_ref, scale_ref, shift_ref, res_ref, o_ref):
    y = y_ref[...].astype(jnp.float32)
    r = res_ref[...].astype(jnp.float32)
    o_ref[...] = jnp.maximum(y * scale_ref[...] + shift_ref[...] + r,
                             0.0).astype(o_ref.dtype)


def _bn_act(y2d, scale, shift, residual, out_dtype):
    m, c = y2d.shape
    tm = min(EPI_TILE, m)                    # ragged last block handled by Pallas
    grid = (pl.cdiv(m, tm),)
    row_spec = pl.BlockSpec((tm, c), lambda i: (i, 0))
    vec_spec = pl.BlockSpec((1, c), lambda i: (0, 0))
    params = pltpu.CompilerParams(dimension_semantics=("parallel",),
                                  vmem_limit_bytes=VMEM_LIMIT)
    if residual is None:
        return pl.pallas_call(
            _bn_relu_kernel,
            out_shape=jax.ShapeDtypeStruct((m, c), out_dtype),
            grid=grid,
            in_specs=[row_spec, vec_spec, vec_spec],
            out_specs=row_spec,
            compiler_params=params,
        )(y2d, scale, shift)
    return pl.pallas_call(
        _bn_add_relu_kernel,
        out_shape=jax.ShapeDtypeStruct((m, c), out_dtype),
        grid=grid,
        in_specs=[row_spec, vec_spec, vec_spec, row_spec],
        out_specs=row_spec,
        compiler_params=params,
    )(y2d, scale, shift, residual)


# --------------------------------------------------------------------------
# Cheap XLA glue: layout prep only (3x width-tap packing, no 9x im2col)
# --------------------------------------------------------------------------
def _pack_input(x_nhwc, stride):
    """Spatially pad by 1 and fold the 3 kw taps into the channel/contraction
    dim; for stride 2, also group rows by parity so every kh tap becomes a
    contiguous leading-axis row slice inside the kernel.

    Returns (packed, offs, ho, wo):
      packed : (n, R, wo, 3*c)
      offs   : offs[kh] such that output row i of tap kh reads packed row offs[kh]+i
    """
    n, h, w, c = x_nhwc.shape
    xp = jnp.pad(x_nhwc, ((0, 0), (1, 1), (1, 1), (0, 0)))
    if stride == 1:
        ho, wo = h, w
        cols = [xp[:, :, kw:kw + wo, :] for kw in range(3)]
        packed = jnp.concatenate(cols, axis=-1)                   # (n, h+2, wo, 3c)
        offs = [0, 1, 2]
    else:
        ho, wo = h // 2, w // 2
        cols = [xp[:, :, kw:kw + 2 * wo:2, :] for kw in range(3)]  # cols 2j+kw
        packed = jnp.concatenate(cols, axis=-1)                    # (n, h+2, wo, 3c)
        hq = ho + 1
        packed = packed.reshape(n, hq, 2, wo, 3 * c)               # [even|odd] rows
        packed = packed.transpose(0, 2, 1, 3, 4).reshape(n, 2 * hq, wo, 3 * c)
        offs = [0, hq, 1]   # kh=0: even rows, kh=1: odd rows, kh=2: even rows + 1
    return packed, offs, ho, wo


def _pack_weight(w_oihw, kp, cout_p):
    """(Cout, Cin, 3, 3) -> (3[kh], Kp, Cout_p) with K index = kw*Cin + c."""
    cout, cin, kh, kw = w_oihw.shape
    wkt = jnp.transpose(w_oihw, (2, 3, 1, 0)).reshape(kh, kw * cin, cout)
    wkt = jnp.pad(wkt, ((0, 0), (0, kp - kw * cin), (0, cout_p - cout)))
    return wkt.astype(jnp.bfloat16)


def _bn_scale_shift(stats_sum, m_total, gamma, beta, cout_p):
    mean = stats_sum[0] / m_total
    var = jnp.maximum(stats_sum[1] / m_total - mean * mean, 0.0)   # biased variance
    scale = _pad_vec(gamma, cout_p) * jax.lax.rsqrt(var + EPS)
    shift = _pad_vec(beta, cout_p) - mean * scale
    return scale.reshape(1, cout_p), shift.reshape(1, cout_p)


# --------------------------------------------------------------------------
# BasicBlock forward (NCHW in, NCHW out — same as the PyTorch module)
# --------------------------------------------------------------------------
def basic_block_forward(x_nchw, params, initial_stride):
    n, cin, h, w = x_nchw.shape
    cout = params["w1"].shape[0]
    assert initial_stride in (1, 2)
    if initial_stride == 2:
        assert h % 2 == 0 and w % 2 == 0 and cout >= cin
    else:
        assert cin == cout     # identity shortcut requires matching channels

    cout_p = _round_up(cout, LANES)
    x_nhwc = jnp.transpose(x_nchw, (0, 2, 3, 1))

    # ---- conv1 + fused BN stats (bias b1 omitted: cancelled by batch-stat BN)
    ph1, offs1, ho, wo = _pack_input(x_nhwc.astype(jnp.bfloat16), initial_stride)
    kp1 = _round_up(3 * cin, LANES)
    ph1 = _pad_last(ph1, kp1)
    y1, st1 = _conv_stats(ph1, _pack_weight(params["w1"], kp1, cout_p),
                          offs1, ho, wo)
    m_tot = n * ho * wo
    scale1, shift1 = _bn_scale_shift(jnp.sum(st1, axis=0), m_tot,
                                     params["g1"], params["beta1"], cout_p)

    # ---- norm1 + ReLU: streaming FMA pass; bf16 output feeds conv2's MXU
    r1 = _bn_act(y1.reshape(m_tot, cout_p), scale1, shift1,
                 residual=None, out_dtype=jnp.bfloat16)
    r1_nhwc = r1.reshape(n, ho, wo, cout_p)
    if cout != cout_p:
        r1_nhwc = r1_nhwc[..., :cout]       # drop zero channels before K-packing

    # ---- conv2 + fused BN stats (stride 1; bias b2 likewise cancelled)
    ph2, offs2, _, _ = _pack_input(r1_nhwc, 1)
    kp2 = _round_up(3 * cout, LANES)
    ph2 = _pad_last(ph2, kp2)
    y2, st2 = _conv_stats(ph2, _pack_weight(params["w2"], kp2, cout_p),
                          offs2, ho, wo)
    scale2, shift2 = _bn_scale_shift(jnp.sum(st2, axis=0), m_tot,
                                     params["g2"], params["beta2"], cout_p)

    # ---- shortcut path (XLA glue: F.avg_pool2d(x, 2) + zero channel pad), bf16
    if initial_stride == 2:
        pooled = x_nhwc.reshape(n, ho, 2, wo, 2, cin).mean(axis=(2, 4))
        short = _pad_last(pooled, cout_p)
    else:
        short = _pad_last(x_nhwc, cout_p)
    short = short.reshape(m_tot, cout_p).astype(jnp.bfloat16)

    # ---- norm2 + residual add + final ReLU fused into one streaming pass
    out = _bn_act(y2.reshape(m_tot, cout_p), scale2, shift2,
                  residual=short, out_dtype=jnp.float32)
    out = out.reshape(n, ho, wo, cout_p)[..., :cout]
    return jnp.transpose(out, (0, 3, 1, 2))


# --------------------------------------------------------------------------
# Pure-JAX reference (correctness check only)
# --------------------------------------------------------------------------
def _ref_forward(x, params, stride):
    def conv(z, wgt, b, s):
        y = jax.lax.conv_general_dilated(
            z, wgt, (s, s), ((1, 1), (1, 1)),
            dimension_numbers=("NCHW", "OIHW", "NCHW"))
        return y + b[None, :, None, None]

    def bn(y, g, beta):
        mean = y.mean(axis=(0, 2, 3), keepdims=True)
        var = ((y - mean) ** 2).mean(axis=(0, 2, 3), keepdims=True)
        return (y - mean) * jax.lax.rsqrt(var + EPS) * g[None, :, None, None] \
            + beta[None, :, None, None]

    r = jnp.maximum(bn(conv(x, params["w1"], params["b1"], stride),
                       params["g1"], params["beta1"]), 0.0)
    r = bn(conv(r, params["w2"], params["b2"], 1), params["g2"], params["beta2"])
    if stride > 1:
        n, cin, h, w = x.shape
        cout = params["w1"].shape[0]
        pooled = x.reshape(n, cin, h // 2, 2, w // 2, 2).mean(axis=(3, 5))
        x = jnp.concatenate(
            [pooled, jnp.zeros((n, cout - cin, h // 2, w // 2), x.dtype)], axis=1)
    return jnp.maximum(x + r, 0.0)


def _make_params(key, cin, cout):
    ks = jax.random.split(key, 8)
    return {
        "w1": 0.1 * jax.random.normal(ks[0], (cout, cin, 3, 3), jnp.float32),
        "b1": 0.1 * jax.random.normal(ks[1], (cout,), jnp.float32),
        "g1": 1.0 + 0.1 * jax.random.normal(ks[2], (cout,), jnp.float32),
        "beta1": 0.1 * jax.random.normal(ks[3], (cout,), jnp.float32),
        "w2": 0.1 * jax.random.normal(ks[4], (cout, cout, 3, 3), jnp.float32),
        "b2": 0.1 * jax.random.normal(ks[5], (cout,), jnp.float32),
        "g2": 1.0 + 0.1 * jax.random.normal(ks[6], (cout,), jnp.float32),
        "beta2": 0.1 * jax.random.normal(ks[7], (cout,), jnp.float32),
    }


if __name__ == "__main__":
    key = jax.random.PRNGKey(0)
    _, k_p1, k_p2, k_x1, k_x2 = jax.random.split(key, 5)

    # Case 1: downsampling block (stride 2, 4 -> 8 channels)
    n, cin, h, w, cout, stride = 2, 4, 16, 16, 8, 2
    params = _make_params(k_p1, cin, cout)
    x = jax.random.normal(k_x1, (n, cin, h, w), jnp.float32)
    out = jax.block_until_ready(basic_block_forward(x, params, stride))
    ref = jax.block_until_ready(_ref_forward(x, params, stride))
    assert out.shape == (n, cout, h // stride, w // stride)
    # bf16 MXU inputs + bf16 intermediate y / residual -> relaxed tolerance
    assert jnp.allclose(out, ref, atol=4e-2, rtol=4e-2), \
        float(jnp.max(jnp.abs(out - ref)))

    # Case 2: identity-shortcut block (stride 1, 8 -> 8 channels)
    params1 = _make_params(k_p2, 8, 8)
    x1 = jax.random.normal(k_x2, (2, 8, 16, 16), jnp.float32)
    out1 = jax.block_until_ready(basic_block_forward(x1, params1, 1))
    ref1 = jax.block_until_ready(_ref_forward(x1, params1, 1))
    assert out1.shape == (2, 8, 16, 16)
    assert jnp.allclose(out1, ref1, atol=4e-2, rtol=4e-2), \
        float(jnp.max(jnp.abs(out1 - ref1)))

    print("KERNEL_OK")
</pallas_src>

<mosaic_0001>
module attributes {stable_mosaic.version = 11 : i64} {
  func.func @_conv_stats_kernel(%arg0: i32, %arg1: memref<1x18x8x128xbf16, #tpu.memory_space<vmem>>, %arg2: memref<3x128x128xbf16, #tpu.memory_space<vmem>>, %arg3: memref<1x64x128xbf16, #tpu.memory_space<vmem>>, %arg4: memref<1x2x128xf32, #tpu.memory_space<vmem>>, %arg5: memref<64x128xf32, #tpu.memory_space<vmem>>) attributes {dimension_semantics = [#tpu.dimension_semantics<parallel>], iteration_bounds = array<i64: 2>, scalar_prefetch = 0 : i64, scratch_operands = 1 : i64, tpu.core_type = #tpu.core_type<tc>, window_params = [{transform_indices = @transform_0, window_bounds = array<i64: 1, 18, 8, 128>}, {pipeline_mode = #tpu.pipeline_mode<synchronous>, transform_indices = @transform_1, window_bounds = array<i64: 3, 128, 128>}, {transform_indices = @transform_2, window_bounds = array<i64: 1, 64, 128>}, {transform_indices = @transform_3, window_bounds = array<i64: 1, 2, 128>}]} {
    %c0 = arith.constant 0 : index
    %c0_0 = arith.constant 0 : index
    %c0_1 = arith.constant 0 : index
    %c0_2 = arith.constant 0 : index
    %0 = vector.load %arg1[%c0, %c0_0, %c0_1, %c0_2] : memref<1x18x8x128xbf16, #tpu.memory_space<vmem>>, vector<1x8x8x128xbf16>
    %1 = vector.shape_cast %0 : vector<1x8x8x128xbf16> to vector<8x8x128xbf16>
    %2 = vector.shape_cast %1 : vector<8x8x128xbf16> to vector<64x128xbf16>
    %c0_3 = arith.constant 0 : index
    %c0_4 = arith.constant 0 : index
    %c0_5 = arith.constant 0 : index
    %3 = vector.load %arg2[%c0_3, %c0_4, %c0_5] : memref<3x128x128xbf16, #tpu.memory_space<vmem>>, vector<1x128x128xbf16>
    %4 = vector.shape_cast %3 : vector<1x128x128xbf16> to vector<128x128xbf16>
    %cst = arith.constant dense<0.000000e+00> : vector<64x128xf32>
    %5 = tpu.matmul %2, %4, %cst {dimension_numbers = #tpu.dot_dimension_numbers<[1], [0], [0], [1], [0, 0, 1, 1], [], []>} : vector<64x128xbf16>, vector<128x128xbf16>, vector<64x128xf32> -> vector<64x128xf32>
    %c0_6 = arith.constant 0 : index
    %c0_7 = arith.constant 0 : index
    %6 = vector.load %arg5[%c0_6, %c0_7] : memref<64x128xf32, #tpu.memory_space<vmem>>, vector<64x128xf32>
    tpu.vector_store %arg5[%c0_6, %c0_7], %5 {strides = array<i32>} : memref<64x128xf32, #tpu.memory_space<vmem>>, vector<64x128xf32>,
    %c0_8 = arith.constant 0 : index
    %c9 = arith.constant 9 : index
    %c0_9 = arith.constant 0 : index
    %c0_10 = arith.constant 0 : index
    %7 = vector.load %arg1[%c0_8, %c9, %c0_9, %c0_10] : memref<1x18x8x128xbf16, #tpu.memory_space<vmem>>, vector<1x8x8x128xbf16>
    %8 = vector.shape_cast %7 : vector<1x8x8x128xbf16> to vector<8x8x128xbf16>
    %9 = vector.shape_cast %8 : vector<8x8x128xbf16> to vector<64x128xbf16>
    %c1 = arith.constant 1 : index
    %c0_11 = arith.constant 0 : index
    %c0_12 = arith.constant 0 : index
    %10 = vector.load %arg2[%c1, %c0_11, %c0_12] : memref<3x128x128xbf16, #tpu.memory_space<vmem>>, vector<1x128x128xbf16>
    %11 = vector.shape_cast %10 : vector<1x128x128xbf16> to vector<128x128xbf16>
    %cst_13 = arith.constant dense<0.000000e+00> : vector<64x128xf32>
    %12 = tpu.matmul %9, %11, %cst_13 {dimension_numbers = #tpu.dot_dimension_numbers<[1], [0], [0], [1], [0, 0, 1, 1], [], []>} : vector<64x128xbf16>, vector<128x128xbf16>, vector<64x128xf32> -> vector<64x128xf32>
    %c0_14 = arith.constant 0 : index
    %c0_15 = arith.constant 0 : index
    %13 = vector.load %arg5[%c0_14, %c0_15] : memref<64x128xf32, #tpu.memory_space<vmem>>, vector<64x128xf32>
    %14 = arith.addf %13, %12 : vector<64x128xf32>
    %c0_16 = arith.constant 0 : index
    %c0_17 = arith.constant 0 : index
    %15 = vector.load %arg5[%c0_16, %c0_17] : memref<64x128xf32, #tpu.memory_space<vmem>>, vector<64x128xf32>
    tpu.vector_store %arg5[%c0_16, %c0_17], %14 {strides = array<i32>} : memref<64x128xf32, #tpu.memory_space<vmem>>, vector<64x128xf32>,
    %c0_18 = arith.constant 0 : index
    %c1_19 = arith.constant 1 : index
    %c0_20 = arith.constant 0 : index
    %c0_21 = arith.constant 0 : index
    %16 = vector.load %arg1[%c0_18, %c1_19, %c0_20, %c0_21] : memref<1x18x8x128xbf16, #tpu.memory_space<vmem>>, vector<1x8x8x128xbf16>
    %17 = vector.shape_cast %16 : vector<1x8x8x128xbf16> to vector<8x8x128xbf16>
    %18 = vector.shape_cast %17 : vector<8x8x128xbf16> to vector<64x128xbf16>
    %c2 = arith.constant 2 : index
    %c0_22 = arith.constant 0 : index
    %c0_23 = arith.constant 0 : index
    %19 = vector.load %arg2[%c2, %c0_22, %c0_23] : memref<3x128x128xbf16, #tpu.memory_space<vmem>>, vector<1x128x128xbf16>
    %20 = vector.shape_cast %19 : vector<1x128x128xbf16> to vector<128x128xbf16>
    %cst_24 = arith.constant dense<0.000000e+00> : vector<64x128xf32>
    %21 = tpu.matmul %18, %20, %cst_24 {dimension_numbers = #tpu.dot_dimension_numbers<[1], [0], [0], [1], [0, 0, 1, 1], [], []>} : vector<64x128xbf16>, vector<128x128xbf16>, vector<64x128xf32> -> vector<64x128xf32>
    %c0_25 = arith.constant 0 : index
    %c0_26 = arith.constant 0 : index
    %22 = vector.load %arg5[%c0_25, %c0_26] : memref<64x128xf32, #tpu.memory_space<vmem>>, vector<64x128xf32>
    %23 = arith.addf %22, %21 : vector<64x128xf32>
    %c0_27 = arith.constant 0 : index
    %c0_28 = arith.constant 0 : index
    %24 = vector.load %arg5[%c0_27, %c0_28] : memref<64x128xf32, #tpu.memory_space<vmem>>, vector<64x128xf32>
    tpu.vector_store %arg5[%c0_27, %c0_28], %23 {strides = array<i32>} : memref<64x128xf32, #tpu.memory_space<vmem>>, vector<64x128xf32>,
    %c0_29 = arith.constant 0 : index
    %c0_30 = arith.constant 0 : index
    %25 = vector.load %arg5[%c0_29, %c0_30] : memref<64x128xf32, #tpu.memory_space<vmem>>, vector<64x128xf32>
    %26 = arith.truncf %25 : vector<64x128xf32> to vector<64x128xbf16>
    %c0_31 = arith.constant 0 : index
    %c0_32 = arith.constant 0 : index
    %c0_33 = arith.constant 0 : index
    %27 = vector.load %arg3[%c0_31, %c0_32, %c0_33] : memref<1x64x128xbf16, #tpu.memory_space<vmem>>, vector<1x64x128xbf16>
    %28 = vector.shape_cast %27 : vector<1x64x128xbf16> to vector<64x128xbf16>
    %29 = vector.shape_cast %26 : vector<64x128xbf16> to vector<1x64x128xbf16>
    tpu.vector_store %arg3[%c0_31, %c0_32, %c0_33], %29 {strides = array<i32>} : memref<1x64x128xbf16, #tpu.memory_space<vmem>>, vector<1x64x128xbf16>,
    %cst_34 = arith.constant dense<0.000000e+00> : vector<128xf32>
    %30 = vector.multi_reduction <add>, %25, %cst_34 [0] : vector<64x128xf32> to vector<128xf32>
    %31 = vector.shape_cast %30 : vector<128xf32> to vector<1x128xf32>
    %c0_35 = arith.constant 0 : index
    %c0_36 = arith.constant 0 : index
    %c0_37 = arith.constant 0 : index
    %32 = vector.load %arg4[%c0_35, %c0_36, %c0_37] : memref<1x2x128xf32, #tpu.memory_space<vmem>>, vector<1x1x128xf32>
    %33 = vector.shape_cast %32 : vector<1x1x128xf32> to vector<1x128xf32>
    %34 = vector.shape_cast %31 : vector<1x128xf32> to vector<1x1x128xf32>
    tpu.vector_store %arg4[%c0_35, %c0_36, %c0_37], %34 {strides = array<i32>} : memref<1x2x128xf32, #tpu.memory_space<vmem>>, vector<1x1x128xf32>,
    %35 = arith.mulf %25, %25 : vector<64x128xf32>
    %cst_38 = arith.constant dense<0.000000e+00> : vector<128xf32>
    %36 = vector.multi_reduction <add>, %35, %cst_38 [0] : vector<64x128xf32> to vector<128xf32>
    %37 = vector.shape_cast %36 : vector<128xf32> to vector<1x128xf32>
    %c0_39 = arith.constant 0 : index
    %c1_40 = arith.constant 1 : index
    %c0_41 = arith.constant 0 : index
    %38 = vector.load %arg4[%c0_39, %c1_40, %c0_41] : memref<1x2x128xf32, #tpu.memory_space<vmem>>, vector<1x1x128xf32>
    %39 = vector.shape_cast %38 : vector<1x1x128xf32> to vector<1x128xf32>
    %40 = vector.shape_cast %37 : vector<1x128xf32> to vector<1x1x128xf32>
    tpu.vector_store %arg4[%c0_39, %c1_40, %c0_41], %40 {strides = array<i32>} : memref<1x2x128xf32, #tpu.memory_space<vmem>>, vector<1x1x128xf32>,
    return
  }
  func.func @transform_0(%arg0: i32) -> (i32, i32, i32, i32) {
    %c0_i32 = arith.constant 0 : i32
    %c0_i32_0 = arith.constant 0 : i32
    %c0_i32_1 = arith.constant 0 : i32
    %c0_i32_2 = arith.constant 0 : i32
    return %arg0, %c0_i32, %c0_i32_0, %c0_i32_1 : i32, i32, i32, i32
  }
  func.func @transform_1(%arg0: i32) -> (i32, i32, i32) {
    %c0_i32 = arith.constant 0 : i32
    %c0_i32_0 = arith.constant 0 : i32
    %c0_i32_1 = arith.constant 0 : i32
    %c0_i32_2 = arith.constant 0 : i32
    return %c0_i32, %c0_i32_0, %c0_i32_1 : i32, i32, i32
  }
  func.func @transform_2(%arg0: i32) -> (i32, i32, i32) {
    %c0_i32 = arith.constant 0 : i32
    %c0_i32_0 = arith.constant 0 : i32
    %c0_i32_1 = arith.constant 0 : i32
    return %arg0, %c0_i32, %c0_i32_0 : i32, i32, i32
  }
  func.func @transform_3(%arg0: i32) -> (i32, i32, i32) {
    %c0_i32 = arith.constant 0 : i32
    %c0_i32_0 = arith.constant 0 : i32
    %c0_i32_1 = arith.constant 0 : i32
    return %arg0, %c0_i32, %c0_i32_0 : i32, i32, i32
  }
}

</mosaic_0001>

<llo_original>
// kernel: tpu_custom_call.1
$region0: #{tpu_custom_call.1}
  #allocation0 [shape = 'u32[]', space=smem, size = 0x4, offset = 0x4, fixed_abs, tag = 'smem constant byte address 0x4 - core index']
  #allocation1 [shape = 'u32[72,128]{1,0:T(1,128)}', space=vmem, size = 0x9000, scoped, tag = 'internal scratch']
  #allocation2 [shape = 'f32[64,128]{1,0:T(8,128)}', space=vmem, size = 0x8000, scoped, tag = 'scratch operand']
  %s0 = inlined_call_operand.hbm [shape: bf16[2,18,8,128], index: 0, kind: input, shape index: {}]
  %s1 = inlined_call_operand.hbm [shape: bf16[3,128,128], index: 1, kind: input, shape index: {}]
  %s2 = inlined_call_operand.hbm [shape: bf16[2,64,128], index: 2, kind: output, shape index: {0}]
  %s3 = inlined_call_operand.hbm [shape: f32[2,2,128], index: 3, kind: output, shape index: {1}]
  %4 = xla_tuple %s2, %s3
  %s5 = sld [smem:[#allocation0]]
  $region57: #{tpu_custom_call.1} parent=0
    _
  %s7 = ssub.s32 1, %s5
  %s8 = scalar_select 0, %s7, %s5
  $region1: #{tpu_custom_call.1} parent=0
    #allocation3 [shape = 'u8[73728]{0}', space=vmem, size = 0x12000, scoped, tag = 'input window, operand 0']
    #allocation4 [shape = 's32[2]{0}', space=sflag, size = 0x8, scoped, tag = 'scoped memory for tpu_custom_call.1']
    #allocation5 [shape = 's32[2]{0}', space=sflag, size = 0x8, scoped, tag = 'scoped memory for tpu_custom_call.1']
    #allocation6 [shape = 'u8[98304]{0}', space=vmem, size = 0x18000, scoped, tag = 'input window, operand 1, single buffered']
    #allocation7 [shape = 's32[1]{0}', space=sflag, size = 0x4, scoped, tag = 'scoped memory for tpu_custom_call.1']
    #allocation8 [shape = 'u8[32768]{0}', space=vmem, size = 0x8000, scoped, tag = 'output window, operand 0']
    #allocation9 [shape = 'u8[2048]{0}', space=vmem, size = 0x800, scoped, tag = 'output window, operand 1']
    #allocation10 [shape = 's32[2]{0}', space=sflag, size = 0x8, scoped, tag = 'scoped memory for tpu_custom_call.1']
    %9 = vsyncpa [#allocation4], 0
    %s10 = scalar_lea.sflag [#allocation4], 1
    %11 = vsyncpa %s10, 0
    %12 = vsyncpa [#allocation7], 0
    %13 = vsyncpa [#allocation5], 0
    %s14 = scalar_lea.sflag [#allocation5], 1
    %15 = vsyncpa %s14, 0
    %16 = vsyncpa [#allocation10], 0
    %s17 = scalar_lea.sflag [#allocation10], 1
    %18 = vsyncpa %s17, 0
    loop: start=0, step=1, limit=4
    $region2: #{tpu_custom_call.1} parent=1 // loop_pre_header
      _
    $region3: #{tpu_custom_call.1} parent=1 // loop_header
      %s20 = sphi 0, %s24
      %p21 = scmp.ge.s32.totalorder %s20, 4
      %s30 = sphi 0, %s32
      %s33 = sphi 0, %s30
      %s34 = sphi 0, %s33
      %s50 = sphi 0, %s34
      %s54 = sphi 0, %s54
      %s56 = sphi 0, %s54
      %s57 = sphi 0, %s56
      %s71 = sphi 0, %s57
      %s77 = sphi 0, %s79
      %s80 = sphi 0, %s77
      %s81 = sphi 0, %s80
      %s97 = sphi 0, %s81
      %s103 = sphi 0, %s105
      %s106 = sphi 0, %s103
      %s107 = sphi 0, %s106
      %s123 = sphi 0, %s107
    $region4: #{tpu_custom_call.1} parent=1 // loop_header_branch
      %23 = sbr.rel (%p21) target = $region8
    $region5: #{tpu_custom_call.1} parent=1 // loop_body
      %s25 = ssub.s32 %s20, 1
      %s26 = ssub.s32 %s20, 2
      %s27 = sadd.s32 %s20, 1
      %s28 = ssub.s32 %s20, %s27
      %p29 = scmp.eq.s32.totalorder %s28, 0
      %s31 = sadd.s32 %s30, 1
      %s32 = scalar_select %p29, %s30, %s31
      %p35 = pneg %p29
      %p36 = scmp.eq.s32.totalorder %s20, 1
      %p37 = por %p35, %p36
      %p38 = scmp.ne.s32.totalorder %s30, %s33
      %p39 = scmp.eq.s32.totalorder %s20, 0
      %p40 = por %p38, %p39
      %p41 = scmp.ne.s32.totalorder %s30, %s33
      %p42 = scmp.eq.s32.totalorder %s25, 1
      %p43 = por %p41, %p42
      %p44 = scmp.ne.s32.totalorder %s33, %s34
      %p45 = scmp.eq.s32.totalorder %s25, 0
      %p46 = por %p44, %p45
      %p47 = scmp.ne.s32.totalorder %s33, %s34
      %p48 = scmp.eq.s32.totalorder %s26, 1
      %p49 = por %p47, %p48
      %p51 = scmp.ne.s32.totalorder %s34, %s50
      %p52 = scmp.eq.s32.totalorder %s26, 0
      %p53 = por %p51, %p52
      %s55 = sadd.s32 %s54, 1
      %p58 = scmp.eq.s32.totalorder %s20, 1
      %p59 = scmp.ne.s32.totalorder %s54, %s56
      %p60 = scmp.eq.s32.totalorder %s20, 0
      %p61 = por %p59, %p60
      %p62 = scmp.ne.s32.totalorder %s54, %s56
      %p63 = scmp.eq.s32.totalorder %s25, 1
      %p64 = por %p62, %p63
      %p65 = scmp.ne.s32.totalorder %s56, %s57
      %p66 = scmp.eq.s32.totalorder %s25, 0
      %p67 = por %p65, %p66
      %p68 = scmp.ne.s32.totalorder %s56, %s57
      %p69 = scmp.eq.s32.totalorder %s26, 1
      %p70 = por %p68, %p69
      %p72 = scmp.ne.s32.totalorder %s57, %s71
      %p73 = scmp.eq.s32.totalorder %s26, 0
      %p74 = por %p72, %p73
      %s75 = ssub.s32 %s20, %s27
      %p76 = scmp.eq.s32.totalorder %s75, 0
      %s78 = sadd.s32 %s77, 1
      %s79 = scalar_select %p76, %s77, %s78
      %p82 = pneg %p76
      %p83 = scmp.eq.s32.totalorder %s20, 1
      %p84 = por %p82, %p83
      %p85 = scmp.ne.s32.totalorder %s77, %s80
      %p86 = scmp.eq.s32.totalorder %s20, 0
      %p87 = por %p85, %p86
      %p88 = scmp.ne.s32.totalorder %s77, %s80
      %p89 = scmp.eq.s32.totalorder %s25, 1
      %p90 = por %p88, %p89
      %p91 = scmp.ne.s32.totalorder %s80, %s81
      %p92 = scmp.eq.s32.totalorder %s25, 0
      %p93 = por %p91, %p92
      %p94 = scmp.ne.s32.totalorder %s80, %s81
      %p95 = scmp.eq.s32.totalorder %s26, 1
      %p96 = por %p94, %p95
      %p98 = scmp.ne.s32.totalorder %s81, %s97
      %p99 = scmp.eq.s32.totalorder %s26, 0
      %p100 = por %p98, %p99
      %s101 = ssub.s32 %s20, %s27
      %p102 = scmp.eq.s32.totalorder %s101, 0
      %s104 = sadd.s32 %s103, 1
      %s105 = scalar_select %p102, %s103, %s104
      %p108 = pneg %p102
      %p109 = scmp.eq.s32.totalorder %s20, 1
      %p110 = por %p108, %p109
      %p111 = scmp.ne.s32.totalorder %s103, %s106
      %p112 = scmp.eq.s32.totalorder %s20, 0
      %p113 = por %p111, %p112
      %p114 = scmp.ne.s32.totalorder %s103, %s106
      %p115 = scmp.eq.s32.totalorder %s25, 1
      %p116 = por %p114, %p115
      %p117 = scmp.ne.s32.totalorder %s106, %s107
      %p118 = scmp.eq.s32.totalorder %s25, 0
      %p119 = por %p117, %p118
      %p120 = scmp.ne.s32.totalorder %s106, %s107
      %p121 = scmp.eq.s32.totalorder %s26, 1
      %p122 = por %p120, %p121
      %p124 = scmp.ne.s32.totalorder %s107, %s123
      %p125 = scmp.eq.s32.totalorder %s26, 0
      %p126 = por %p124, %p125
      %p127 = scmp.le.s32.totalorder 1, %s20
      %p128 = scmp.lt.s32.totalorder %s20, 3
      %p129 = pnand %p127, %p128
      %p130 = pneg %p129
      // Predicated region
      $region9: #{tpu_custom_call.1} parent=5 // pred_check
        _
      $region10: #{tpu_custom_call.1} parent=5 // pred_check_branch
        %132 = sbr.rel (%p129) target = $region12
      $region11: #{tpu_custom_call.1} parent=5 // pred_region
        %s133 = ssub.s32 %s20, 1
        // Predicated region
        $region13: #{tpu_custom_call.1} parent=11 // pred_check
          %p134 = pneg %p67
        $region14: #{tpu_custom_call.1} parent=11 // pred_check_branch
          %136 = sbr.rel (%p134) target = $region16
        $region15: #{tpu_custom_call.1} parent=11 // pred_region
          %138 = vsyncadd [#allocation7], 0
          %s139 = sshll.u32 %s1, 4
          %s140 = int_to_ptr.hbm [resolvable:$true] %s139
          %s141 = sshll.u32 [#allocation6], 4
          %s142 = int_to_ptr.vmem [resolvable:$true] %s141
          %147 = dma.hbm_to_vmem [thread:$0]  %s140, 3072, %s142, [#allocation7], 64, 64, 4
        $region16: #{tpu_custom_call.1} parent=11 // pred_fallthru
          _
      $region12: #{tpu_custom_call.1} parent=5 // pred_fallthru
        _
      %p148 = scmp.lt.s32.totalorder %s20, 2
      // Predicated region
      $region17: #{tpu_custom_call.1} parent=5 // pred_check
        %p149 = pneg %p148
      $region18: #{tpu_custom_call.1} parent=5 // pred_check_branch
        %151 = sbr.rel (%p149) target = $region20
      $region19: #{tpu_custom_call.1} parent=5 // pred_region
        // Predicated region
        $region21: #{tpu_custom_call.1} parent=19 // pred_check
          %p152 = pneg %p40
        $region22: #{tpu_custom_call.1} parent=19 // pred_check_branch
          %154 = sbr.rel (%p152) target = $region24
        $region23: #{tpu_custom_call.1} parent=19 // pred_region
          %s155 = sand.u32 %s30, 1
          %s156 = scalar_lea.sflag [#allocation4], %s155
          %s157 = sand.u32 %s30, 1
          %s158 = smul.addr %s157, 72
          %s159 = scalar_lea.vmem [#allocation3], %s158
          %161 = vsyncadd %s156, 0
          %s162 = smul.addr %s20, 18
          %s163 = smul.addr %s162, 4
          %s164 = scalar_lea.hbm %s0, %s163
          %s165 = sshll.u32 %s164, 4
          %s166 = int_to_ptr.hbm [resolvable:$true] %s165
          %s167 = sshll.u32 %s159, 4
          %s168 = int_to_ptr.vmem [resolvable:$true] %s167
          %173 = dma.hbm_to_vmem [thread:$0]  %s166, 1152, %s168, %s156, 64, 64, 4
        $region24: #{tpu_custom_call.1} parent=19 // pred_fallthru
          _
      $region20: #{tpu_custom_call.1} parent=5 // pred_fallthru
        _
      %p174 = scmp.le.s32.totalorder 1, %s20
      %p175 = scmp.lt.s32.totalorder %s20, 3
      %p176 = pnand %p174, %p175
      %p177 = pneg %p176
      // Predicated region
      $region25: #{tpu_custom_call.1} parent=5 // pred_check
        _
      $region26: #{tpu_custom_call.1} parent=5 // pred_check_branch
        %179 = sbr.rel (%p176) target = $region28
      $region27: #{tpu_custom_call.1} parent=5 // pred_region
        %s180 = ssub.s32 %s20, 1
        %s181 = sand.u32 %s33, 1
        %s182 = scalar_lea.sflag [#allocation4], %s181
        %s183 = sand.u32 %s33, 1
        %s184 = smul.addr %s183, 72
        %s185 = scalar_lea.vmem [#allocation3], %s184
        // Predicated region
        $region29: #{tpu_custom_call.1} parent=27 // pred_check
          %p186 = pneg %p46
        $region30: #{tpu_custom_call.1} parent=27 // pred_check_branch
          %188 = sbr.rel (%p186) target = $region32
        $region31: #{tpu_custom_call.1} parent=27 // pred_region
          %190 = dma.done %s182, 1152
        $region32: #{tpu_custom_call.1} parent=27 // pred_fallthru
          _
        // Predicated region
        $region33: #{tpu_custom_call.1} parent=27 // pred_check
          %p191 = pneg %p67
        $region34: #{tpu_custom_call.1} parent=27 // pred_check_branch
          %193 = sbr.rel (%p191) target = $region36
        $region35: #{tpu_custom_call.1} parent=27 // pred_region
          %195 = dma.done [#allocation7], 3072
        $region36: #{tpu_custom_call.1} parent=27 // pred_fallthru
          _
        %s196 = sand.u32 %s33, 1
        %s197 = scalar_lea.sflag [#allocation4], %s196
        %s198 = sand.u32 %s33, 1
        %s199 = smul.addr %s198, 72
        %s200 = scalar_lea.vmem [#allocation3], %s199
        %p201 = pneg %p46
        %p202 = pneg %p43
        %p203 = pneg %p67
        %p204 = pneg %p64
        %p205 = pneg %p93
        %p206 = pneg %p90
        %s207 = sand.u32 %s80, 1
        %s208 = scalar_lea.sflag [#allocation5], %s207
        %s209 = sand.u32 %s80, 1
        %s210 = smul.addr %s209, 32
        %s211 = scalar_lea.vmem [#allocation8], %s210
        %p212 = pneg %p119
        %p213 = pneg %p116
        %s214 = sand.u32 %s106, 1
        %s215 = scalar_lea.sflag [#allocation10], %s214
        %s216 = sand.u32 %s106, 1
        %s217 = smul.addr %s216, 2
        %s218 = scalar_lea.vmem [#allocation9], %s217
        %v219 = vld [vmem:[%s185] sm:$0xf]
        %v220 = vld [vmem:[%s185 + $0x4] sm:$0xf]
        %v221 = vld [vmem:[%s185 + $0x8] sm:$0xf]
        %v222 = vld [vmem:[%s185 + $0xc] sm:$0xf]
        %v223 = vld [vmem:[%s185 + $0x10] sm:$0xf]
        %v224 = vld [vmem:[%s185 + $0x14] sm:$0xf]
        %v225 = vld [vmem:[%s185 + $0x18] sm:$0xf]
        %v226 = vld [vmem:[%s185 + $0x1c] sm:$0xf]
        %v227 = vld [vmem:[#allocation6] sm:$0xf]
        %v228 = vld [vmem:[#allocation6 + $0x4] sm:$0xf]
        %v229 = vld [vmem:[#allocation6 + $0x8] sm:$0xf]
        %v230 = vld [vmem:[#allocation6 + $0xc] sm:$0xf]
        %v231 = vld [vmem:[#allocation6 + $0x10] sm:$0xf]
        %v232 = vld [vmem:[#allocation6 + $0x14] sm:$0xf]
        %v233 = vld [vmem:[#allocation6 + $0x18] sm:$0xf]
        %v234 = vld [vmem:[#allocation6 + $0x1c] sm:$0xf]
        %v235 = vld [vmem:[#allocation6 + $0x20] sm:$0xf]
        %v236 = vld [vmem:[#allocation6 + $0x24] sm:$0xf]
        %v237 = vld [vmem:[#allocation6 + $0x28] sm:$0xf]
        %v238 = vld [vmem:[#allocation6 + $0x2c] sm:$0xf]
        %v239 = vld [vmem:[#allocation6 + $0x30] sm:$0xf]
        %v240 = vld [vmem:[#allocation6 + $0x34] sm:$0xf]
        %v241 = vld [vmem:[#allocation6 + $0x38] sm:$0xf]
        %v242 = vld [vmem:[#allocation6 + $0x3c] sm:$0xf]
        %v251 = vunpack.c.l.b16 %v219
        %v252 = vunpack.c.l.b16 %v220
        %v253 = vunpack.c.l.b16 %v221
        %v254 = vunpack.c.l.b16 %v222
        %v255 = vunpack.c.l.b16 %v223
        %v256 = vunpack.c.l.b16 %v224
        %v257 = vunpack.c.l.b16 %v225
        %v258 = vunpack.c.l.b16 %v226
        %v259 = vpack.c.b16 %v252, %v251
        %v260 = vpack.c.b16 %v254, %v253
        %v261 = vpack.c.b16 %v256, %v255
        %v262 = vpack.c.b16 %v258, %v257
        %v283 = vunpack.c.l.b16 %v227
        %v284 = vunpack.c.l.b16 %v228
        %v285 = vunpack.c.l.b16 %v229
        %v286 = vunpack.c.l.b16 %v230
        %v287 = vunpack.c.l.b16 %v231
        %v288 = vunpack.c.l.b16 %v232
        %v289 = vunpack.c.l.b16 %v233
        %v290 = vunpack.c.l.b16 %v234
        %v291 = vunpack.c.l.b16 %v235
        %v292 = vunpack.c.l.b16 %v236
        %v293 = vunpack.c.l.b16 %v237
        %v294 = vunpack.c.l.b16 %v238
        %v295 = vunpack.c.l.b16 %v239
        %v296 = vunpack.c.l.b16 %v240
        %v297 = vunpack.c.l.b16 %v241
        %v298 = vunpack.c.l.b16 %v242
        %v299 = vpack.c.b16 %v284, %v283
        %v300 = vpack.c.b16 %v286, %v285
        %v301 = vpack.c.b16 %v288, %v287
        %v302 = vpack.c.b16 %v290, %v289
        %v303 = vpack.c.b16 %v292, %v291
        %v304 = vpack.c.b16 %v294, %v293
        %v305 = vpack.c.b16 %v296, %v295
        %v306 = vpack.c.b16 %v298, %v297
        %315 = vmatpush.bf16.msra.mxu0 %v306
        %316 = vmatpush.bf16.msra.mxu0 %v305
        %317 = vmatpush.bf16.msra.mxu0 %v304
        %318 = vmatpush.bf16.msra.mxu0 %v303
        %319 = vmatpush.bf16.msra.mxu0 %v302
        %320 = vmatpush.bf16.msra.mxu0 %v301
        %321 = vmatpush.bf16.msra.mxu0 %v300
        %322 = vmatpush.bf16.msra.mxu0 %v299
        %323 = vmatmul.bf16.gmra.mxu0 %v259
        %v324 = vpop.f32.mrf.mxu0
        %v325 = vadd.f32 0.0, %v324
        %v326 = vpop.f32.mrf.mxu0
        %v327 = vadd.f32 0.0, %v326
        %328 = vmatmul.bf16.gmra.mxu0 %v260
        %v329 = vpop.f32.mrf.mxu0
        %v330 = vadd.f32 0.0, %v329
        %v331 = vpop.f32.mrf.mxu0
        %v332 = vadd.f32 0.0, %v331
        %333 = vmatmul.bf16.gmra.mxu0 %v261
        %v334 = vpop.f32.mrf.mxu0
        %v335 = vadd.f32 0.0, %v334
        %v336 = vpop.f32.mrf.mxu0
        %v337 = vadd.f32 0.0, %v336
        %338 = vmatmul.bf16.gmra.mxu0 %v262
        %v339 = vpop.f32.mrf.mxu0
        %v340 = vadd.f32 0.0, %v339
        %v341 = vpop.f32.mrf.mxu0
        %v342 = vadd.f32 0.0, %v341
        %343 = vdwg.mxu0
        %344 = vst [vmem:[#allocation2] sm:$0xff] %v325
        %345 = vst [vmem:[#allocation2 + $0x8] sm:$0xff] %v327
        %346 = vst [vmem:[#allocation2 + $0x10] sm:$0xff] %v330
        %347 = vst [vmem:[#allocation2 + $0x18] sm:$0xff] %v332
        %348 = vst [vmem:[#allocation2 + $0x20] sm:$0xff] %v335
        %349 = vst [vmem:[#allocation2 + $0x28] sm:$0xff] %v337
        %350 = vst [vmem:[#allocation2 + $0x30] sm:$0xff] %v340
        %351 = vst [vmem:[#allocation2 + $0x38] sm:$0xff] %v342
        %s352 = scalar_lea.vmem %s185, 36 [#allocation3]
        %v353 = vld [vmem:[%s352] sm:$0xf]
        %v354 = vld [vmem:[%s352 + $0x4] sm:$0xf]
        %v355 = vld [vmem:[%s352 + $0x8] sm:$0xf]
        %v356 = vld [vmem:[%s352 + $0xc] sm:$0xf]
        %v357 = vld [vmem:[%s352 + $0x10] sm:$0xf]
        %v358 = vld [vmem:[%s352 + $0x14] sm:$0xf]
        %v359 = vld [vmem:[%s352 + $0x18] sm:$0xf]
        %v360 = vld [vmem:[%s352 + $0x1c] sm:$0xf]
        %s361 = scalar_lea.vmem [#allocation6], 64
        %v362 = vld [vmem:[%s361] sm:$0xf]
        %v363 = vld [vmem:[%s361 + $0x4] sm:$0xf]
        %v364 = vld [vmem:[%s361 + $0x8] sm:$0xf]
        %v365 = vld [vmem:[%s361 + $0xc] sm:$0xf]
        %v366 = vld [vmem:[%s361 + $0x10] sm:$0xf]
        %v367 = vld [vmem:[%s361 + $0x14] sm:$0xf]
        %v368 = vld [vmem:[%s361 + $0x18] sm:$0xf]
        %v369 = vld [vmem:[%s361 + $0x1c] sm:$0xf]
        %v370 = vld [vmem:[%s361 + $0x20] sm:$0xf]
        %v371 = vld [vmem:[%s361 + $0x24] sm:$0xf]
        %v372 = vld [vmem:[%s361 + $0x28] sm:$0xf]
        %v373 = vld [vmem:[%s361 + $0x2c] sm:$0xf]
        %v374 = vld [vmem:[%s361 + $0x30] sm:$0xf]
        %v375 = vld [vmem:[%s361 + $0x34] sm:$0xf]
        %v376 = vld [vmem:[%s361 + $0x38] sm:$0xf]
        %v377 = vld [vmem:[%s361 + $0x3c] sm:$0xf]
        %v386 = vunpack.c.l.b16 %v353
        %v387 = vunpack.c.l.b16 %v354
        %v388 = vunpack.c.l.b16 %v355
        %v389 = vunpack.c.l.b16 %v356
        %v390 = vunpack.c.l.b16 %v357
        %v391 = vunpack.c.l.b16 %v358
        %v392 = vunpack.c.l.b16 %v359
        %v393 = vunpack.c.l.b16 %v360
        %v394 = vpack.c.b16 %v387, %v386
        %v395 = vpack.c.b16 %v389, %v388
        %v396 = vpack.c.b16 %v391, %v390
        %v397 = vpack.c.b16 %v393, %v392
        %v418 = vunpack.c.l.b16 %v362
        %v419 = vunpack.c.l.b16 %v363
        %v420 = vunpack.c.l.b16 %v364
        %v421 = vunpack.c.l.b16 %v365
        %v422 = vunpack.c.l.b16 %v366
        %v423 = vunpack.c.l.b16 %v367
        %v424 = vunpack.c.l.b16 %v368
        %v425 = vunpack.c.l.b16 %v369
        %v426 = vunpack.c.l.b16 %v370
        %v427 = vunpack.c.l.b16 %v371
        %v428 = vunpack.c.l.b16 %v372
        %v429 = vunpack.c.l.b16 %v373
        %v430 = vunpack.c.l.b16 %v374
        %v431 = vunpack.c.l.b16 %v375
        %v432 = vunpack.c.l.b16 %v376
        %v433 = vunpack.c.l.b16 %v377
        %v434 = vpack.c.b16 %v419, %v418
        %v435 = vpack.c.b16 %v421, %v420
        %v436 = vpack.c.b16 %v423, %v422
        %v437 = vpack.c.b16 %v425, %v424
        %v438 = vpack.c.b16 %v427, %v426
        %v439 = vpack.c.b16 %v429, %v428
        %v440 = vpack.c.b16 %v431, %v430
        %v441 = vpack.c.b16 %v433, %v432
        %450 = vmatpush.bf16.msra.mxu0 %v441
        %451 = vmatpush.bf16.msra.mxu0 %v440
        %452 = vmatpush.bf16.msra.mxu0 %v439
        %453 = vmatpush.bf16.msra.mxu0 %v438
        %454 = vmatpush.bf16.msra.mxu0 %v437
        %455 = vmatpush.bf16.msra.mxu0 %v436
        %456 = vmatpush.bf16.msra.mxu0 %v435
        %457 = vmatpush.bf16.msra.mxu0 %v434
        %458 = vmatmul.bf16.gmra.mxu0 %v394
        %v459 = vpop.f32.mrf.mxu0
        %v460 = vadd.f32 0.0, %v459
        %v461 = vpop.f32.mrf.mxu0
        %v462 = vadd.f32 0.0, %v461
        %463 = vmatmul.bf16.gmra.mxu0 %v395
        %v464 = vpop.f32.mrf.mxu0
        %v465 = vadd.f32 0.0, %v464
        %v466 = vpop.f32.mrf.mxu0
        %v467 = vadd.f32 0.0, %v466
        %468 = vmatmul.bf16.gmra.mxu0 %v396
        %v469 = vpop.f32.mrf.mxu0
        %v470 = vadd.f32 0.0, %v469
        %v471 = vpop.f32.mrf.mxu0
        %v472 = vadd.f32 0.0, %v471
        %473 = vmatmul.bf16.gmra.mxu0 %v397
        %v474 = vpop.f32.mrf.mxu0
        %v475 = vadd.f32 0.0, %v474
        %v476 = vpop.f32.mrf.mxu0
        %v477 = vadd.f32 0.0, %v476
        %478 = vdwg.mxu0
        %v479 = vld [vmem:[#allocation2] sm:$0xff]
        %v480 = vld [vmem:[#allocation2 + $0x8] sm:$0xff]
        %v481 = vld [vmem:[#allocation2 + $0x10] sm:$0xff]
        %v482 = vld [vmem:[#allocation2 + $0x18] sm:$0xff]
        %v483 = vld [vmem:[#allocation2 + $0x20] sm:$0xff]
        %v484 = vld [vmem:[#allocation2 + $0x28] sm:$0xff]
        %v485 = vld [vmem:[#allocation2 + $0x30] sm:$0xff]
        %v486 = vld [vmem:[#allocation2 + $0x38] sm:$0xff]
        %v487 = vadd.f32 %v479, %v460
        %v488 = vadd.f32 %v480, %v462
        %v489 = vadd.f32 %v481, %v465
        %v490 = vadd.f32 %v482, %v467
        %v491 = vadd.f32 %v483, %v470
        %v492 = vadd.f32 %v484, %v472
        %v493 = vadd.f32 %v485, %v475
        %v494 = vadd.f32 %v486, %v477
        %495 = vst [vmem:[#allocation2] sm:$0xff] %v487
        %496 = vst [vmem:[#allocation2 + $0x8] sm:$0xff] %v488
        %497 = vst [vmem:[#allocation2 + $0x10] sm:$0xff] %v489
        %498 = vst [vmem:[#allocation2 + $0x18] sm:$0xff] %v490
        %499 = vst [vmem:[#allocation2 + $0x20] sm:$0xff] %v491
        %500 = vst [vmem:[#allocation2 + $0x28] sm:$0xff] %v492
        %501 = vst [vmem:[#allocation2 + $0x30] sm:$0xff] %v493
        %502 = vst [vmem:[#allocation2 + $0x38] sm:$0xff] %v494
        %s503 = scalar_lea.vmem %s185, 4 [#allocation3]
        %v504 = vld [vmem:[%s503] sm:$0xf]
        %v505 = vld [vmem:[%s503 + $0x4] sm:$0xf]
        %v506 = vld [vmem:[%s503 + $0x8] sm:$0xf]
        %v507 = vld [vmem:[%s503 + $0xc] sm:$0xf]
        %v508 = vld [vmem:[%s503 + $0x10] sm:$0xf]
        %v509 = vld [vmem:[%s503 + $0x14] sm:$0xf]
        %v510 = vld [vmem:[%s503 + $0x18] sm:$0xf]
        %v511 = vld [vmem:[%s503 + $0x1c] sm:$0xf]
        %s512 = scalar_lea.vmem [#allocation6], 128
        %v513 = vld [vmem:[%s512] sm:$0xf]
        %v514 = vld [vmem:[%s512 + $0x4] sm:$0xf]
        %v515 = vld [vmem:[%s512 + $0x8] sm:$0xf]
        %v516 = vld [vmem:[%s512 + $0xc] sm:$0xf]
        %v517 = vld [vmem:[%s512 + $0x10] sm:$0xf]
        %v518 = vld [vmem:[%s512 + $0x14] sm:$0xf]
        %v519 = vld [vmem:[%s512 + $0x18] sm:$0xf]
        %v520 = vld [vmem:[%s512 + $0x1c] sm:$0xf]
        %v521 = vld [vmem:[%s512 + $0x20] sm:$0xf]
        %v522 = vld [vmem:[%s512 + $0x24] sm:$0xf]
        %v523 = vld [vmem:[%s512 + $0x28] sm:$0xf]
        %v524 = vld [vmem:[%s512 + $0x2c] sm:$0xf]
        %v525 = vld [vmem:[%s512 + $0x30] sm:$0xf]
        %v526 = vld [vmem:[%s512 + $0x34] sm:$0xf]
        %v527 = vld [vmem:[%s512 + $0x38] sm:$0xf]
        %v528 = vld [vmem:[%s512 + $0x3c] sm:$0xf]
        %v537 = vunpack.c.l.b16 %v504
        %v538 = vunpack.c.l.b16 %v505
        %v539 = vunpack.c.l.b16 %v506
        %v540 = vunpack.c.l.b16 %v507
        %v541 = vunpack.c.l.b16 %v508
        %v542 = vunpack.c.l.b16 %v509
        %v543 = vunpack.c.l.b16 %v510
        %v544 = vunpack.c.l.b16 %v511
        %v545 = vpack.c.b16 %v538, %v537
        %v546 = vpack.c.b16 %v540, %v539
        %v547 = vpack.c.b16 %v542, %v541
        %v548 = vpack.c.b16 %v544, %v543
        %v569 = vunpack.c.l.b16 %v513
        %v570 = vunpack.c.l.b16 %v514
        %v571 = vunpack.c.l.b16 %v515
        %v572 = vunpack.c.l.b16 %v516
        %v573 = vunpack.c.l.b16 %v517
        %v574 = vunpack.c.l.b16 %v518
        %v575 = vunpack.c.l.b16 %v519
        %v576 = vunpack.c.l.b16 %v520
        %v577 = vunpack.c.l.b16 %v521
        %v578 = vunpack.c.l.b16 %v522
        %v579 = vunpack.c.l.b16 %v523
        %v580 = vunpack.c.l.b16 %v524
        %v581 = vunpack.c.l.b16 %v525
        %v582 = vunpack.c.l.b16 %v526
        %v583 = vunpack.c.l.b16 %v527
        %v584 = vunpack.c.l.b16 %v528
        %v585 = vpack.c.b16 %v570, %v569
        %v586 = vpack.c.b16 %v572, %v571
        %v587 = vpack.c.b16 %v574, %v573
        %v588 = vpack.c.b16 %v576, %v575
        %v589 = vpack.c.b16 %v578, %v577
        %v590 = vpack.c.b16 %v580, %v579
        %v591 = vpack.c.b16 %v582, %v581
        %v592 = vpack.c.b16 %v584, %v583
        %601 = vmatpush.bf16.msra.mxu0 %v592
        %602 = vmatpush.bf16.msra.mxu0 %v591
        %603 = vmatpush.bf16.msra.mxu0 %v590
        %604 = vmatpush.bf16.msra.mxu0 %v589
        %605 = vmatpush.bf16.msra.mxu0 %v588
        %606 = vmatpush.bf16.msra.mxu0 %v587
        %607 = vmatpush.bf16.msra.mxu0 %v586
        %608 = vmatpush.bf16.msra.mxu0 %v585
        %609 = vmatmul.bf16.gmra.mxu0 %v545
        %v610 = vpop.f32.mrf.mxu0
        %v611 = vadd.f32 0.0, %v610
        %v612 = vpop.f32.mrf.mxu0
        %v613 = vadd.f32 0.0, %v612
        %614 = vmatmul.bf16.gmra.mxu0 %v546
        %v615 = vpop.f32.mrf.mxu0
        %v616 = vadd.f32 0.0, %v615
        %v617 = vpop.f32.mrf.mxu0
        %v618 = vadd.f32 0.0, %v617
        %619 = vmatmul.bf16.gmra.mxu0 %v547
        %v620 = vpop.f32.mrf.mxu0
        %v621 = vadd.f32 0.0, %v620
        %v622 = vpop.f32.mrf.mxu0
        %v623 = vadd.f32 0.0, %v622
        %624 = vmatmul.bf16.gmra.mxu0 %v548
        %v625 = vpop.f32.mrf.mxu0
        %v626 = vadd.f32 0.0, %v625
        %v627 = vpop.f32.mrf.mxu0
        %v628 = vadd.f32 0.0, %v627
        %629 = vdwg.mxu0
        %v630 = vld [vmem:[#allocation2] sm:$0xff]
        %v631 = vld [vmem:[#allocation2 + $0x8] sm:$0xff]
        %v632 = vld [vmem:[#allocation2 + $0x10] sm:$0xff]
        %v633 = vld [vmem:[#allocation2 + $0x18] sm:$0xff]
        %v634 = vld [vmem:[#allocation2 + $0x20] sm:$0xff]
        %v635 = vld [vmem:[#allocation2 + $0x28] sm:$0xff]
        %v636 = vld [vmem:[#allocation2 + $0x30] sm:$0xff]
        %v637 = vld [vmem:[#allocation2 + $0x38] sm:$0xff]
        %v638 = vadd.f32 %v630, %v611
        %v639 = vadd.f32 %v631, %v613
        %v640 = vadd.f32 %v632, %v616
        %v641 = vadd.f32 %v633, %v618
        %v642 = vadd.f32 %v634, %v621
        %v643 = vadd.f32 %v635, %v623
        %v644 = vadd.f32 %v636, %v626
        %v645 = vadd.f32 %v637, %v628
        %646 = vst [vmem:[#allocation2] sm:$0xff] %v638
        %647 = vst [vmem:[#allocation2 + $0x8] sm:$0xff] %v639
        %648 = vst [vmem:[#allocation2 + $0x10] sm:$0xff] %v640
        %649 = vst [vmem:[#allocation2 + $0x18] sm:$0xff] %v641
        %650 = vst [vmem:[#allocation2 + $0x20] sm:$0xff] %v642
        %651 = vst [vmem:[#allocation2 + $0x28] sm:$0xff] %v643
        %652 = vst [vmem:[#allocation2 + $0x30] sm:$0xff] %v644
        %653 = vst [vmem:[#allocation2 + $0x38] sm:$0xff] %v645
        %v654 = vld [vmem:[#allocation2] sm:$0xff]
        %v655 = vld [vmem:[#allocation2 + $0x8] sm:$0xff]
        %v656 = vld [vmem:[#allocation2 + $0x10] sm:$0xff]
        %v657 = vld [vmem:[#allocation2 + $0x18] sm:$0xff]
        %v658 = vld [vmem:[#allocation2 + $0x20] sm:$0xff]
        %v659 = vld [vmem:[#allocation2 + $0x28] sm:$0xff]
        %v660 = vld [vmem:[#allocation2 + $0x30] sm:$0xff]
        %v661 = vld [vmem:[#allocation2 + $0x38] sm:$0xff]
        %v662 = vpack.c.bf16 %v654, %v654
        %v663 = vpack.c.bf16 %v655, %v655
        %v664 = vpack.c.bf16 %v656, %v656
        %v665 = vpack.c.bf16 %v657, %v657
        %v666 = vpack.c.bf16 %v658, %v658
        %v667 = vpack.c.bf16 %v659, %v659
        %v668 = vpack.c.bf16 %v660, %v660
        %v669 = vpack.c.bf16 %v661, %v661
        %670 = vst [vmem:[%s211] sm:$0xf] %v662
        %671 = vst [vmem:[%s211 + $0x4] sm:$0xf] %v663
        %672 = vst [vmem:[%s211 + $0x8] sm:$0xf] %v664
        %673 = vst [vmem:[%s211 + $0xc] sm:$0xf] %v665
        %674 = vst [vmem:[%s211 + $0x10] sm:$0xf] %v666
        %675 = vst [vmem:[%s211 + $0x14] sm:$0xf] %v667
        %676 = vst [vmem:[%s211 + $0x18] sm:$0xf] %v668
        %677 = vst [vmem:[%s211 + $0x1c] sm:$0xf] %v669
        %v678 = vadd.f32 %v654, %v655
        %v679 = vadd.f32 %v678, %v656
        %v680 = vadd.f32 %v679, %v657
        %v681 = vadd.f32 %v680, %v658
        %v682 = vadd.f32 %v681, %v659
        %v683 = vadd.f32 %v682, %v660
        %v684 = vadd.f32 %v683, %v661
        %v685 = vrot.slane %v684, 4
        %v686 = vadd.f32 %v684, %v685
        %v687 = vrot.slane %v686, 2
        %v688 = vadd.f32 %v686, %v687
        %v689 = vrot.slane %v688, 1
        %v690 = vadd.f32 %v688, %v689
        %691 = vst [vmem:[%s218] sm:$0x1] %v690
        %v692 = vmul.f32 %v654, %v654
        %v693 = vmul.f32 %v655, %v655
        %v694 = vmul.f32 %v656, %v656
        %v695 = vmul.f32 %v657, %v657
        %v696 = vmul.f32 %v658, %v658
        %v697 = vmul.f32 %v659, %v659
        %v698 = vmul.f32 %v660, %v660
        %v699 = vmul.f32 %v661, %v661
        %v700 = vadd.f32 %v692, %v693
        %v701 = vadd.f32 %v700, %v694
        %v702 = vadd.f32 %v701, %v695
        %v703 = vadd.f32 %v702, %v696
        %v704 = vadd.f32 %v703, %v697
        %v705 = vadd.f32 %v704, %v698
        %v706 = vadd.f32 %v705, %v699
        %v707 = vrot.slane %v706, 4
        %v708 = vadd.f32 %v706, %v707
        %v709 = vrot.slane %v708, 2
        %v710 = vadd.f32 %v708, %v709
        %v711 = vrot.slane %v710, 1
        %v712 = vadd.f32 %v710, %v711
        %713 = vst [vmem:[%s218 + $0x1] sm:$0x1] %v712
        %s714 = sand.u32 %s80, 1
        %s715 = scalar_lea.sflag [#allocation5], %s714
        %s716 = sand.u32 %s80, 1
        %s717 = smul.addr %s716, 32
        %s718 = scalar_lea.vmem [#allocation8], %s717
        %s719 = sand.u32 %s106, 1
        %s720 = scalar_lea.sflag [#allocation10], %s719
        %s721 = sand.u32 %s106, 1
        %s722 = smul.addr %s721, 2
        %s723 = scalar_lea.vmem [#allocation9], %s722
        // Predicated region
        $region37: #{tpu_custom_call.1} parent=27 // pred_check
          %p724 = pneg %p90
        $region38: #{tpu_custom_call.1} parent=27 // pred_check_branch
          %726 = sbr.rel (%p724) target = $region40
        $region39: #{tpu_custom_call.1} parent=27 // pred_region
          %728 = vsyncadd %s715, 0
          %s729 = smul.addr %s25, 8
          %s730 = smul.addr %s729, 4
          %s731 = scalar_lea.hbm %s2, %s730
          %s732 = sshll.u32 %s718, 4
          %s733 = int_to_ptr.vmem [resolvable:$true] %s732
          %s734 = sshll.u32 %s731, 4
          %s735 = int_to_ptr.hbm [resolvable:$true] %s734
          %740 = dma.vmem_to_hbm [thread:$0]  %s733, 512, %s735, %s715, 64, 64, 4
        $region40: #{tpu_custom_call.1} parent=27 // pred_fallthru
          _
        // Predicated region
        $region41: #{tpu_custom_call.1} parent=27 // pred_check
          %p741 = pneg %p116
        $region42: #{tpu_custom_call.1} parent=27 // pred_check_branch
          %743 = sbr.rel (%p741) target = $region44
        $region43: #{tpu_custom_call.1} parent=27 // pred_region
          %745 = vsyncadd %s720, 0
          %s746 = smul.addr %s25, 2
          %s747 = scalar_lea.hbm %s3, %s746
          %s749 = sshll.u32 %s723, 4
          %s750 = int_to_ptr.vmem [resolvable:$true] %s749
          %s751 = sshll.u32 %s747, 4
          %s752 = int_to_ptr.hbm [resolvable:$true] %s751
          %754 = dma.vmem_to_hbm [thread:$0]  %s750, 32, %s752, %s720
        $region44: #{tpu_custom_call.1} parent=27 // pred_fallthru
          _
      $region28: #{tpu_custom_call.1} parent=5 // pred_fallthru
        _
      %p755 = scmp.le.s32.totalorder 2, %s20
      // Predicated region
      $region45: #{tpu_custom_call.1} parent=5 // pred_check
        %p756 = pneg %p755
      $region46: #{tpu_custom_call.1} parent=5 // pred_check_branch
        %758 = sbr.rel (%p756) target = $region48
      $region47: #{tpu_custom_call.1} parent=5 // pred_region
        %s759 = ssub.s32 %s20, 2
        // Predicated region
        $region49: #{tpu_custom_call.1} parent=47 // pred_check
          %p760 = pneg %p96
        $region50: #{tpu_custom_call.1} parent=47 // pred_check_branch
          %762 = sbr.rel (%p760) target = $region52
        $region51: #{tpu_custom_call.1} parent=47 // pred_region
          %s763 = sand.u32 %s81, 1
          %s764 = scalar_lea.sflag [#allocation5], %s763
          %s765 = sand.u32 %s81, 1
          %s766 = smul.addr %s765, 32
          %s767 = scalar_lea.vmem [#allocation8], %s766
          %769 = dma.done %s764, 512
        $region52: #{tpu_custom_call.1} parent=47 // pred_fallthru
          _
        // Predicated region
        $region53: #{tpu_custom_call.1} parent=47 // pred_check
          %p770 = pneg %p122
        $region54: #{tpu_custom_call.1} parent=47 // pred_check_branch
          %772 = sbr.rel (%p770) target = $region56
        $region55: #{tpu_custom_call.1} parent=47 // pred_region
          %s773 = sand.u32 %s107, 1
          %s774 = scalar_lea.sflag [#allocation10], %s773
          %s775 = sand.u32 %s107, 1
          %s776 = smul.addr %s775, 2
          %s777 = scalar_lea.vmem [#allocation9], %s776
          %779 = dma.done %s774, 32
        $region56: #{tpu_custom_call.1} parent=47 // pred_fallthru
          _
      $region48: #{tpu_custom_call.1} parent=5 // pred_fallthru
        _
    $region6: #{tpu_custom_call.1} parent=1 // loop_footer
      %s24 = sadd.s32 1, %s20
    $region7: #{tpu_custom_call.1} parent=1 // loop_footer_branch
      %19 = sbr.rel target = $region3
    $region8: #{tpu_custom_call.1} parent=1 // loop_exit
      _
    %780 = vsyncpa [#allocation4], 1
    %s781 = scalar_lea.sflag [#allocation4], 1
    %782 = vsyncpa %s781, 1
    %783 = vsyncpa [#allocation7], 1
    %784 = vsyncpa [#allocation5], 1
    %s785 = scalar_lea.sflag [#allocation5], 1
    %786 = vsyncpa %s785, 1
    %787 = vsyncpa [#allocation10], 1
    %s788 = scalar_lea.sflag [#allocation10], 1
    %789 = vsyncpa %s788, 1

</llo_original>
